<compile_context>
chip_gen: v6e
topology: v6e:2x2x1
jax: 0.10.0
libtpu: 0.0.40
codegen_flags: <defaults>
</compile_context>

<pallas_src>
import functools

import jax
import jax.numpy as jnp
from jax.experimental import pallas as pl
from jax.experimental.pallas import tpu as pltpu


def _round_up(a, b):
    return (a + b - 1) // b * b


def _cdiv(a, b):
    return (a + b - 1) // b


def _vmem_scoped_limit_bytes():
    try:
        phys = int(pltpu.get_tpu_info().vmem_capacity_bytes)
    except Exception:
        phys = 128 * 1024 * 1024
    # ~64 MiB scoped on 128 MiB parts (v5e/v6e), ~32 MiB on 64 MiB parts (v7x).
    return max(16 * 1024 * 1024, min(64 * 1024 * 1024, phys // 2))


# --------------------------- fast path kernel --------------------------------


def _inorm_fused_kernel(x_ref, params_ref, o_ref, *, eps, inv_n):
    x = x_ref[...].astype(jnp.float32)                      # (tm, n)
    mean = jnp.sum(x, axis=-1, keepdims=True) * inv_n       # (tm, 1)
    xc = x - mean
    # Two-pass variance over the VMEM-resident row: robust vs. E[x^2]-mean^2.
    var = jnp.sum(xc * xc, axis=-1, keepdims=True) * inv_n
    inv_std = jax.lax.rsqrt(var + eps)                      # EUP rsqrt
    params = params_ref[...].astype(jnp.float32)            # (tm, 2)
    scale = params[:, 0:1]
    shift = params[:, 1:2]
    o_ref[...] = (xc * (inv_std * scale) + shift).astype(o_ref.dtype)


# -------------------------- split (large H*W) path ---------------------------


def _inorm_stats_kernel(x_ref, mean_ref, istd_ref, *, eps, inv_n, n, tk):
    k = pl.program_id(1)

    @pl.when(k == 0)
    def _():
        mean_ref[...] = jnp.zeros_like(mean_ref)
        istd_ref[...] = jnp.zeros_like(istd_ref)

    x = x_ref[...].astype(jnp.float32)                      # (tm, tk)
    # Mask lanes past the valid spatial extent (ragged last spatial block).
    lane = jax.lax.broadcasted_iota(jnp.int32, x.shape, dimension=1)
    x = jnp.where(lane < (n - k * tk), x, 0.0)
    mean_ref[...] += jnp.sum(x, axis=-1, keepdims=True)     # running sum
    istd_ref[...] += jnp.sum(x * x, axis=-1, keepdims=True)  # running sumsq

    @pl.when(k == pl.num_programs(1) - 1)
    def _():
        mean = mean_ref[...] * inv_n
        # One-pass variance here (x is not resident across spatial blocks);
        # clamp tiny negative values from cancellation.
        var = jnp.maximum(istd_ref[...] * inv_n - mean * mean, 0.0)
        mean_ref[...] = mean
        istd_ref[...] = jax.lax.rsqrt(var + eps)


def _inorm_apply_kernel(x_ref, mean_ref, istd_ref, params_ref, o_ref):
    x = x_ref[...].astype(jnp.float32)
    params = params_ref[...].astype(jnp.float32)
    g = istd_ref[...] * params[:, 0:1]
    b = params[:, 1:2]
    o_ref[...] = ((x - mean_ref[...]) * g + b).astype(o_ref.dtype)


# --------------------------------- wrapper -----------------------------------


def instance_normalization(x, scale, shift, eps=1e-9, *, force_spatial_split=False):
    """x: (N, C, H, W); scale, shift: (C,). Returns (N, C, H, W)."""
    N, C, H, W = x.shape
    n = H * W
    rows = N * C
    itemsize = jnp.dtype(x.dtype).itemsize
    pack = max(8, 32 // itemsize)        # native sublane packing per dtype

    xf = x.reshape(rows, n)              # free reshape, no HBM traffic
    # Row r -> channel r % C; single (rows, 2) [scale, shift] parameter array.
    params = jnp.stack([jnp.tile(scale, N), jnp.tile(shift, N)], axis=-1).astype(jnp.float32)

    vmem_limit = _vmem_scoped_limit_bytes()
    budget = int(vmem_limit * 0.8)
    # Per-element footprint: double-buffered in + out (native dtype) plus
    # ~3 f32 intermediates inside the kernel.
    # TODO(synk): for bf16 inputs the normalize arithmetic could stay in bf16
    # on v6e/v7x to halve intermediate VMEM; kept in f32 for accuracy.
    bytes_per_elem = 4 * itemsize + 3 * 4

    def pick_tm(width):
        tm = max(pack, (budget // (width * bytes_per_elem)) // pack * pack)
        if rows >= 2 * pack:
            # Keep >= 2 row tiles so megacore (v7x) can shard the parallel axis.
            tm = min(tm, _round_up((rows + 1) // 2, pack))
        if tm >= rows:
            tm = rows                    # block dim equal to full array dim is legal
        return tm

    inv_n = 1.0 / float(n)
    eps = float(eps)

    use_split = force_spatial_split or (pack * n * bytes_per_elem > budget)
    if n <= 128:
        use_split = False                # spatial tile must be a multiple of 128

    if not use_split:
        # ---------------- fast path: full-width row blocks -------------------
        tm = pick_tm(n)
        num_row_tiles = _cdiv(rows, tm)
        kernel = functools.partial(_inorm_fused_kernel, eps=eps, inv_n=inv_n)
        out = pl.pallas_call(
            kernel,
            out_shape=jax.ShapeDtypeStruct((rows, n), x.dtype),
            grid=(num_row_tiles,),
            in_specs=[
                pl.BlockSpec((tm, n), lambda i: (i, 0)),
                pl.BlockSpec((tm, 2), lambda i: (i, 0)),
            ],
            out_specs=pl.BlockSpec((tm, n), lambda i: (i, 0)),
            compiler_params=pltpu.CompilerParams(
                dimension_semantics=("parallel",),
                vmem_limit_bytes=vmem_limit,
            ),
            cost_estimate=pl.CostEstimate(
                flops=6 * rows * n,
                transcendentals=rows,
                bytes_accessed=2 * rows * n * itemsize + rows * 8,
            ),
        )(xf, params)
        return out.reshape(N, C, H, W)

    # ------------- split path: spatial grid axis + accumulators --------------
    tk_cap = max(128, (budget // (pack * bytes_per_elem)) // 128 * 128)
    tk = min((n // 128) * 128, tk_cap)
    tm = pick_tm(tk)
    num_row_tiles = _cdiv(rows, tm)
    num_k_tiles = _cdiv(n, tk)

    stats_kernel = functools.partial(
        _inorm_stats_kernel, eps=eps, inv_n=inv_n, n=n, tk=tk)
    mean, istd = pl.pallas_call(
        stats_kernel,
        out_shape=(jax.ShapeDtypeStruct((rows, 1), jnp.float32),
                   jax.ShapeDtypeStruct((rows, 1), jnp.float32)),
        grid=(num_row_tiles, num_k_tiles),
        in_specs=[pl.BlockSpec((tm, tk), lambda i, k: (i, k))],
        out_specs=(pl.BlockSpec((tm, 1), lambda i, k: (i, 0)),
                   pl.BlockSpec((tm, 1), lambda i, k: (i, 0))),
        compiler_params=pltpu.CompilerParams(
            dimension_semantics=("parallel", "arbitrary"),
            vmem_limit_bytes=vmem_limit,
        ),
        cost_estimate=pl.CostEstimate(
            flops=3 * rows * n,
            transcendentals=rows,
            bytes_accessed=rows * n * itemsize + rows * 8,
        ),
    )(xf)

    out = pl.pallas_call(
        _inorm_apply_kernel,
        out_shape=jax.ShapeDtypeStruct((rows, n), x.dtype),
        grid=(num_row_tiles, num_k_tiles),
        in_specs=[
            pl.BlockSpec((tm, tk), lambda i, k: (i, k)),
            pl.BlockSpec((tm, 1), lambda i, k: (i, 0)),
            pl.BlockSpec((tm, 1), lambda i, k: (i, 0)),
            pl.BlockSpec((tm, 2), lambda i, k: (i, 0)),
        ],
        out_specs=pl.BlockSpec((tm, tk), lambda i, k: (i, k)),
        compiler_params=pltpu.CompilerParams(
            dimension_semantics=("parallel", "parallel"),
            vmem_limit_bytes=vmem_limit,
        ),
        cost_estimate=pl.CostEstimate(
            flops=4 * rows * n,
            transcendentals=0,
            bytes_accessed=2 * rows * n * itemsize + rows * 16,
        ),
    )(xf, mean, istd, params)
    return out.reshape(N, C, H, W)


# -------------------------------- reference ----------------------------------


def _reference(x, scale, shift, eps=1e-9):
    N, C, H, W = x.shape
    n = H * W
    t = x.reshape(N, C, n).astype(jnp.float32)
    mean = jnp.mean(t, axis=2, keepdims=True)
    var = jnp.mean((t - mean) ** 2, axis=2, keepdims=True)   # population var
    y = (t - mean) / jnp.sqrt(var + eps)
    y = y * scale[None, :, None] + shift[None, :, None]
    return y.reshape(N, C, H, W)


if __name__ == "__main__":
    key = jax.random.PRNGKey(0)
    kx, ks = jax.random.split(key)

    # Deterministic parameter init mirroring _reset_parameters:
    # scale ~ Uniform[0, 1), shift = 0.
    N, C, H, W = 2, 4, 16, 16
    x = jax.random.normal(kx, (N, C, H, W), dtype=jnp.float32)
    scale = jax.random.uniform(ks, (C,), dtype=jnp.float32)
    shift = jnp.zeros((C,), dtype=jnp.float32)

    # Fast (fused, full-width) path.
    out = jax.block_until_ready(instance_normalization(x, scale, shift, eps=1e-9))
    ref = _reference(x, scale, shift, eps=1e-9)
    assert jnp.allclose(out, ref, atol=1e-4, rtol=1e-4), "fast path mismatch"

    # Exercise the spatial-split (two-kernel) path on a small ragged shape
    # (n = 153, not a multiple of 128) to ensure it compiles and masks correctly.
    H2, W2 = 9, 17
    x2 = jax.random.normal(kx, (N, C, H2, W2), dtype=jnp.float32)
    out2 = jax.block_until_ready(
        instance_normalization(x2, scale, shift, eps=1e-9, force_spatial_split=True))
    ref2 = _reference(x2, scale, shift, eps=1e-9)
    assert jnp.allclose(out2, ref2, atol=1e-4, rtol=1e-4), "split path mismatch"

    print("KERNEL_OK")
</pallas_src>

<mosaic_0001>
module attributes {stable_mosaic.version = 11 : i64} {
  func.func @_inorm_fused_kernel(%arg0: i32, %arg1: memref<8x256xf32, #tpu.memory_space<vmem>>, %arg2: memref<8x2xf32, #tpu.memory_space<vmem>>, %arg3: memref<8x256xf32, #tpu.memory_space<vmem>>) attributes {dimension_semantics = [#tpu.dimension_semantics<parallel>], iteration_bounds = array<i64: 1>, scalar_prefetch = 0 : i64, scratch_operands = 0 : i64, tpu.core_type = #tpu.core_type<tc>, window_params = [{transform_indices = @transform_0, window_bounds = array<i64: 8, 256>}, {transform_indices = @transform_1, window_bounds = array<i64: 8, 2>}, {transform_indices = @transform_2, window_bounds = array<i64: 8, 256>}]} {
    %c0 = arith.constant 0 : index
    %c0_0 = arith.constant 0 : index
    %0 = vector.load %arg1[%c0, %c0_0] : memref<8x256xf32, #tpu.memory_space<vmem>>, vector<8x256xf32>
    %cst = arith.constant dense<0.000000e+00> : vector<8xf32>
    %1 = vector.multi_reduction <add>, %0, %cst [1] : vector<8x256xf32> to vector<8xf32>
    %2 = vector.shape_cast %1 : vector<8xf32> to vector<8x1xf32>
    %cst_1 = arith.constant 3.906250e-03 : f32
    %3 = vector.broadcast %cst_1 : f32 to vector<8x1xf32>
    %4 = arith.mulf %2, %3 : vector<8x1xf32>
    %5 = vector.broadcast %4 : vector<8x1xf32> to vector<8x256xf32>
    %6 = arith.subf %0, %5 : vector<8x256xf32>
    %7 = arith.mulf %6, %6 : vector<8x256xf32>
    %cst_2 = arith.constant dense<0.000000e+00> : vector<8xf32>
    %8 = vector.multi_reduction <add>, %7, %cst_2 [1] : vector<8x256xf32> to vector<8xf32>
    %9 = vector.shape_cast %8 : vector<8xf32> to vector<8x1xf32>
    %cst_3 = arith.constant 3.906250e-03 : f32
    %10 = vector.broadcast %cst_3 : f32 to vector<8x1xf32>
    %11 = arith.mulf %9, %10 : vector<8x1xf32>
    %cst_4 = arith.constant 9.99999971E-10 : f32
    %12 = vector.broadcast %cst_4 : f32 to vector<8x1xf32>
    %13 = arith.addf %11, %12 : vector<8x1xf32>
    %14 = math.rsqrt %13 : vector<8x1xf32>
    %c0_5 = arith.constant 0 : index
    %c0_6 = arith.constant 0 : index
    %15 = vector.load %arg2[%c0_5, %c0_6] : memref<8x2xf32, #tpu.memory_space<vmem>>, vector<8x2xf32>
    %16 = vector.extract_strided_slice %15 {offsets = [0, 0], sizes = [8, 1], strides = [1, 1]} : vector<8x2xf32> to vector<8x1xf32>
    %17 = vector.extract_strided_slice %15 {offsets = [0, 1], sizes = [8, 1], strides = [1, 1]} : vector<8x2xf32> to vector<8x1xf32>
    %18 = arith.mulf %14, %16 : vector<8x1xf32>
    %19 = vector.broadcast %18 : vector<8x1xf32> to vector<8x256xf32>
    %20 = arith.mulf %6, %19 : vector<8x256xf32>
    %21 = vector.broadcast %17 : vector<8x1xf32> to vector<8x256xf32>
    %22 = arith.addf %20, %21 : vector<8x256xf32>
    %c0_7 = arith.constant 0 : index
    %c0_8 = arith.constant 0 : index
    %23 = vector.load %arg3[%c0_7, %c0_8] : memref<8x256xf32, #tpu.memory_space<vmem>>, vector<8x256xf32>
    tpu.vector_store %arg3[%c0_7, %c0_8], %22 {strides = array<i32>} : memref<8x256xf32, #tpu.memory_space<vmem>>, vector<8x256xf32>,
    return
  }
  func.func @transform_0(%arg0: i32) -> (i32, i32) {
    %c0_i32 = arith.constant 0 : i32
    %c0_i32_0 = arith.constant 0 : i32
    return %arg0, %c0_i32 : i32, i32
  }
  func.func @transform_1(%arg0: i32) -> (i32, i32) {
    %c0_i32 = arith.constant 0 : i32
    %c0_i32_0 = arith.constant 0 : i32
    return %arg0, %c0_i32 : i32, i32
  }
  func.func @transform_2(%arg0: i32) -> (i32, i32) {
    %c0_i32 = arith.constant 0 : i32
    %c0_i32_0 = arith.constant 0 : i32
    return %arg0, %c0_i32 : i32, i32
  }
}

</mosaic_0001>

<llo_original>
// kernel: tpu_custom_call.1
$region0: #{tpu_custom_call.1}
  #allocation0 [shape = 'u32[]', space=smem, size = 0x4, offset = 0x4, fixed_abs, tag = 'smem constant byte address 0x4 - core index']
  #allocation1 [shape = 'u32[144,128]{1,0:T(1,128)}', space=vmem, size = 0x12000, scoped, tag = 'internal scratch']
  %s0 = inlined_call_operand.hbm [shape: f32[8,256], index: 0, kind: input, shape index: {}]
  %s1 = inlined_call_operand.vmem [shape: f32[8,2], index: 1, kind: input, shape index: {}]
  %s2 = inlined_call_operand.hbm [shape: f32[8,256], index: 2, kind: output, shape index: {}]
  %s3 = sld [smem:[#allocation0]]
  $region22: #{tpu_custom_call.1} parent=0
    _
  %s5 = ssub.s32 1, %s3
  %s6 = scalar_select 0, %s5, %s3
  $region1: #{tpu_custom_call.1} parent=0
    #allocation2 [shape = 'u8[8192]{0}', space=vmem, size = 0x2000, scoped, tag = 'input window, operand 0, single buffered']
    #allocation3 [shape = 's32[1]{0}', space=sflag, size = 0x4, scoped, tag = 'scoped memory for tpu_custom_call.1']
    #allocation4 [shape = 's32[1]{0}', space=sflag, size = 0x4, scoped, tag = 'scoped memory for tpu_custom_call.1']
    #allocation5 [shape = 'u8[8192]{0}', space=vmem, size = 0x2000, scoped, tag = 'output window, operand 0, single buffered']
    %7 = vsyncpa [#allocation3], 0
    %8 = vsyncpa [#allocation4], 0
    // Predicated region
    $region2: #{tpu_custom_call.1} parent=1 // pred_check
      _
    $region3: #{tpu_custom_call.1} parent=1 // pred_check_branch
      %10 = sbr.rel (0) target = $region5
    $region4: #{tpu_custom_call.1} parent=1 // pred_region
      %s12 = ssub.s32 256, 256
      %13 = vsyncadd [#allocation3], %s12
      %s15 = sshll.u32 [#allocation2], 4
      %s16 = int_to_ptr.vmem [resolvable:$true] %s15
      %18 = dma.hbm_to_vmem [thread:$0]  %s0, 256, %s16, [#allocation3]
    $region5: #{tpu_custom_call.1} parent=1 // pred_fallthru
      _
    // Predicated region
    $region6: #{tpu_custom_call.1} parent=1 // pred_check
      _
    $region7: #{tpu_custom_call.1} parent=1 // pred_check_branch
      %20 = sbr.rel (0) target = $region9
    $region8: #{tpu_custom_call.1} parent=1 // pred_region
      _
    $region9: #{tpu_custom_call.1} parent=1 // pred_fallthru
      _
    // Predicated region
    $region10: #{tpu_custom_call.1} parent=1 // pred_check
      _
    $region11: #{tpu_custom_call.1} parent=1 // pred_check_branch
      %22 = sbr.rel (0) target = $region13
    $region12: #{tpu_custom_call.1} parent=1 // pred_region
      %23 = dma.done [#allocation3], 256
    $region13: #{tpu_custom_call.1} parent=1 // pred_fallthru
      _
    %v24 = vld [vmem:[#allocation2] sm:$0xff]
    %v25 = vld [vmem:[#allocation2 + $0x8] sm:$0xff]
    %v26 = vadd.f32 %v24, %v25
    %27 = vadd.xlane.f32.xlu0 %v26
    %v28 = vpop.xlane.xlu0 %27
    %v29 = vmul.f32 %v28, 0.00390625
    %v30 = vsub.f32 %v24, %v29
    %v31 = vsub.f32 %v25, %v29
    %v32 = vmul.f32 %v30, %v30
    %v33 = vmul.f32 %v31, %v31
    %v34 = vadd.f32 %v32, %v33
    %35 = vadd.xlane.f32.xlu0 %v34
    %v36 = vpop.xlane.xlu0 %35
    %v37 = vmul.f32 %v36, 0.00390625
    %v38 = vadd.f32 %v37, 1e-09
    %v39 = vrsqrt.pop %v38
    %v40 = vld [vmem:[%s1] sm:$0xff]
    %v41 = vmul.f32 %v39, %v40
    %43 = vset.pattern.permute.xlu0 0
    %44 = vperm.xlu0 %43, %v41
    %v45 = vpop.permute.xlu0 %44
    %v47 = vmul.f32 %v30, %v45
    %v48 = vmul.f32 %v31, %v45
    %50 = vset.pattern.permute.xlu0 1
    %51 = vperm.xlu0 %50, %v40
    %v52 = vpop.permute.xlu0 %51
    %v54 = vadd.f32 %v47, %v52
    %v55 = vadd.f32 %v48, %v52
    %56 = vst [vmem:[#allocation5] sm:$0xff] %v54
    %57 = vst [vmem:[#allocation5 + $0x8] sm:$0xff] %v55
    // Predicated region
    $region14: #{tpu_custom_call.1} parent=1 // pred_check
      _
    $region15: #{tpu_custom_call.1} parent=1 // pred_check_branch
      %59 = sbr.rel (0) target = $region17
    $region16: #{tpu_custom_call.1} parent=1 // pred_region
      %s61 = ssub.s32 256, 256
      %62 = vsyncadd [#allocation4], %s61
      %s64 = sshll.u32 [#allocation5], 4
      %s65 = int_to_ptr.vmem [resolvable:$true] %s64
      %67 = dma.vmem_to_hbm [thread:$0]  %s65, 256, %s2, [#allocation4]
    $region17: #{tpu_custom_call.1} parent=1 // pred_fallthru
      _
    // Predicated region
    $region18: #{tpu_custom_call.1} parent=1 // pred_check
      _
    $region19: #{tpu_custom_call.1} parent=1 // pred_check_branch
      %69 = sbr.rel (0) target = $region21
    $region20: #{tpu_custom_call.1} parent=1 // pred_region
      %70 = dma.done [#allocation4], 256
    $region21: #{tpu_custom_call.1} parent=1 // pred_fallthru
      _
    %71 = vsyncpa [#allocation3], 1
    %72 = vsyncpa [#allocation4], 1

</llo_original>
